<compile_context>
chip_gen: v5e
topology: v5e:2x2
jax: 0.10.0
libtpu: 0.0.40
codegen_flags: <defaults>
</compile_context>

<pallas_src>
import jax
import jax.numpy as jnp
from jax.experimental import pallas as pl
from jax.experimental.pallas import tpu as pltpu

H1 = 128    # fc1 width (already lane-aligned)
H2 = 64     # fc2 width in the model
H2P = 128   # fc2 width padded to 128 lanes for the kernel
W3P = 128   # fc3 output width padded to 128 lanes for the in-kernel matmul only


def _round_up(x, m):
    return (x + m - 1) // m * m


def _pick_tiles(B, b_tile=None):
    """Choose (batch_tile, padded_batch). Adaptive unless b_tile is given."""
    Bp = _round_up(B, 8)
    if b_tile is not None:
        bt = _round_up(min(b_tile, Bp), 8)
        return bt, _round_up(Bp, bt)
    if Bp <= 512:
        return Bp, Bp                                  # single grid step
    bt = min(2048, _round_up(-(-Bp // 2), 8))          # >= 2 steps (v7x dual-TC)
    return bt, _round_up(Bp, bt)


def qnetwork_kernel(x_ref, w1_ref, b1_ref, w2_ref, b2_ref, w3_ref, b3_ref, out_ref):
    """Fused MLP on one batch tile: relu(relu(x@W1+b1)@W2+b2)@W3+b3, f32 accumulate.

    Matmuls run on 128-lane padded tiles; only the first action_size lanes of
    the result are stored (narrow masked store -> minimal output HBM traffic).
    """
    a = out_ref.shape[1]                                             # action_size
    x = x_ref[...].astype(jnp.bfloat16)                              # (bt, S)
    h1 = jnp.dot(x, w1_ref[...], preferred_element_type=jnp.float32) + b1_ref[...]
    h1 = jnp.maximum(h1, 0.0)                                        # (bt, 128) f32
    h2 = jnp.dot(h1.astype(jnp.bfloat16), w2_ref[...],
                 preferred_element_type=jnp.float32) + b2_ref[...]
    h2 = jnp.maximum(h2, 0.0)                                        # (bt, 128) f32; cols >= 64 are exactly 0
    q = jnp.dot(h2.astype(jnp.bfloat16), w3_ref[...],
                preferred_element_type=jnp.float32) + b3_ref[...]    # (bt, 128) f32
    out_ref[...] = q[:, :a].astype(out_ref.dtype)                    # narrow (bt, A) store


def qnetwork_forward(state, kparams, action_size, *, b_tile=None):
    """state: (B, state_size) float32 -> (B, action_size) float32."""
    B, S = state.shape
    w1, b1 = kparams["w1"], kparams["b1"]
    w2, b2 = kparams["w2"], kparams["b2"]
    w3, b3 = kparams["w3"], kparams["b3"]

    bt, Bp = _pick_tiles(B, b_tile)
    if Bp != B:
        state = jnp.pad(state, ((0, Bp - B), (0, 0)))
    grid = (Bp // bt,)

    # Grid-invariant blocks: weights/biases DMA'd once, resident across all steps.
    const = lambda shape: pl.BlockSpec(shape, lambda i: (0, 0))

    out = pl.pallas_call(
        qnetwork_kernel,
        out_shape=jax.ShapeDtypeStruct((Bp, action_size), jnp.float32),
        grid=grid,
        in_specs=[
            pl.BlockSpec((bt, S), lambda i: (i, 0)),   # x streams per batch tile
            const(w1.shape), const(b1.shape),
            const(w2.shape), const(b2.shape),
            const(w3.shape), const(b3.shape),
        ],
        out_specs=pl.BlockSpec((bt, action_size), lambda i: (i, 0)),
        compiler_params=pltpu.CompilerParams(
            dimension_semantics=("parallel",),
            vmem_limit_bytes=32 << 20,
        ),
    )(state, w1, b1, w2, b2, w3, b3)
    return out if Bp == B else out[:B]


def init_params(key, state_size, action_size):
    """f32 params mirroring nn.Linear init; weights stored as (in, out)."""
    ks = jax.random.split(key, 6)

    def linear(kw, kb, fan_in, fan_out):
        bound = 1.0 / jnp.sqrt(fan_in)
        w = jax.random.uniform(kw, (fan_in, fan_out), jnp.float32, -bound, bound)
        b = jax.random.uniform(kb, (fan_out,), jnp.float32, -bound, bound)
        return w, b

    w1, b1 = linear(ks[0], ks[1], state_size, H1)
    w2, b2 = linear(ks[2], ks[3], H1, H2)
    w3, b3 = linear(ks[4], ks[5], H2, action_size)
    return {"w1": w1, "b1": b1, "w2": w2, "b2": b2, "w3": w3, "b3": b3}


def prepare_kernel_params(raw):
    """Zero-pad hidden2/fc3 dims to 128 lanes; bf16 weights, f32 biases (1, N)."""
    A = raw["w3"].shape[1]
    w1 = raw["w1"].astype(jnp.bfloat16)
    b1 = raw["b1"].reshape(1, H1).astype(jnp.float32)
    w2 = jnp.pad(raw["w2"], ((0, 0), (0, H2P - H2))).astype(jnp.bfloat16)
    b2 = jnp.pad(raw["b2"], (0, H2P - H2)).reshape(1, H2P).astype(jnp.float32)
    w3 = jnp.pad(raw["w3"], ((0, H2P - H2), (0, W3P - A))).astype(jnp.bfloat16)
    b3 = jnp.pad(raw["b3"], (0, W3P - A)).reshape(1, W3P).astype(jnp.float32)
    return {"w1": w1, "b1": b1, "w2": w2, "b2": b2, "w3": w3, "b3": b3}


def reference_forward_mixed(state, kparams, action_size):
    """Same bf16-weight / f32-accumulate arithmetic as the kernel (tight check)."""
    x = state.astype(jnp.bfloat16)
    h1 = jnp.maximum(jnp.dot(x, kparams["w1"], preferred_element_type=jnp.float32)
                     + kparams["b1"], 0.0)
    h2 = jnp.maximum(jnp.dot(h1.astype(jnp.bfloat16), kparams["w2"],
                             preferred_element_type=jnp.float32) + kparams["b2"], 0.0)
    q = jnp.dot(h2.astype(jnp.bfloat16), kparams["w3"],
                preferred_element_type=jnp.float32) + kparams["b3"]
    return q[:, :action_size]


def reference_forward_f32(state, raw):
    """Pure-f32 reference matching the PyTorch module semantics (loose check)."""
    h1 = jnp.maximum(state @ raw["w1"] + raw["b1"], 0.0)
    h2 = jnp.maximum(h1 @ raw["w2"] + raw["b2"], 0.0)
    return h2 @ raw["w3"] + raw["b3"]


if __name__ == "__main__":
    state_size = 8
    action_size = 4
    batch = 2

    key = jax.random.PRNGKey(0)
    k_params, k_state, k_mid, k_big = jax.random.split(key, 4)
    raw = init_params(k_params, state_size, action_size)
    kparams = prepare_kernel_params(raw)

    # Small batch: single grid step, narrow (B, A) output.
    state = jax.random.normal(k_state, (batch, state_size), jnp.float32)
    q = jax.block_until_ready(qnetwork_forward(state, kparams, action_size))
    assert q.shape == (batch, action_size)

    ref_mixed = reference_forward_mixed(state, kparams, action_size)
    ref_f32 = reference_forward_f32(state, raw)
    assert jnp.allclose(q, ref_mixed, atol=2e-3, rtol=2e-3), "mismatch vs bf16/f32-acc reference"
    assert jnp.allclose(q, ref_f32, atol=5e-2, rtol=5e-2), "mismatch vs f32 reference"

    # Multi-tile path with explicit tile override (grid=3, padded batch rows).
    mid_B = 300
    mid_state = jax.random.normal(k_mid, (mid_B, state_size), jnp.float32)
    q_mid = jax.block_until_ready(
        qnetwork_forward(mid_state, kparams, action_size, b_tile=128))
    assert q_mid.shape == (mid_B, action_size)
    assert jnp.allclose(q_mid, reference_forward_mixed(mid_state, kparams, action_size),
                        atol=2e-3, rtol=2e-3), "mismatch on overridden-tile batch"

    # Large batch with adaptive tiling (>= 2 grid steps so v7x can use both TCs).
    big_B = 1200
    big_state = jax.random.normal(k_big, (big_B, state_size), jnp.float32)
    q_big = jax.block_until_ready(qnetwork_forward(big_state, kparams, action_size))
    assert q_big.shape == (big_B, action_size)
    assert jnp.allclose(q_big, reference_forward_mixed(big_state, kparams, action_size),
                        atol=2e-3, rtol=2e-3), "mismatch on adaptive-tiled batch"

    print("KERNEL_OK")
</pallas_src>

<mosaic_0001>
module attributes {stable_mosaic.version = 11 : i64} {
  func.func @qnetwork_kernel(%arg0: i32, %arg1: memref<8x8xf32, #tpu.memory_space<vmem>>, %arg2: memref<8x128xbf16, #tpu.memory_space<vmem>>, %arg3: memref<1x128xf32, #tpu.memory_space<vmem>>, %arg4: memref<128x128xbf16, #tpu.memory_space<vmem>>, %arg5: memref<1x128xf32, #tpu.memory_space<vmem>>, %arg6: memref<128x128xbf16, #tpu.memory_space<vmem>>, %arg7: memref<1x128xf32, #tpu.memory_space<vmem>>, %arg8: memref<8x4xf32, #tpu.memory_space<vmem>>) attributes {dimension_semantics = [#tpu.dimension_semantics<parallel>], iteration_bounds = array<i64: 1>, scalar_prefetch = 0 : i64, scratch_operands = 0 : i64, tpu.core_type = #tpu.core_type<tc>, window_params = [{transform_indices = @transform_0, window_bounds = array<i64: 8, 8>}, {pipeline_mode = #tpu.pipeline_mode<synchronous>, transform_indices = @transform_1, window_bounds = array<i64: 8, 128>}, {pipeline_mode = #tpu.pipeline_mode<synchronous>, transform_indices = @transform_2, window_bounds = array<i64: 1, 128>}, {pipeline_mode = #tpu.pipeline_mode<synchronous>, transform_indices = @transform_3, window_bounds = array<i64: 128, 128>}, {pipeline_mode = #tpu.pipeline_mode<synchronous>, transform_indices = @transform_4, window_bounds = array<i64: 1, 128>}, {pipeline_mode = #tpu.pipeline_mode<synchronous>, transform_indices = @transform_5, window_bounds = array<i64: 128, 128>}, {pipeline_mode = #tpu.pipeline_mode<synchronous>, transform_indices = @transform_6, window_bounds = array<i64: 1, 128>}, {transform_indices = @transform_7, window_bounds = array<i64: 8, 4>}]} {
    %c0 = arith.constant 0 : index
    %c0_0 = arith.constant 0 : index
    %0 = vector.load %arg1[%c0, %c0_0] : memref<8x8xf32, #tpu.memory_space<vmem>>, vector<8x8xf32>
    %1 = arith.truncf %0 : vector<8x8xf32> to vector<8x8xbf16>
    %c0_1 = arith.constant 0 : index
    %c0_2 = arith.constant 0 : index
    %2 = vector.load %arg2[%c0_1, %c0_2] : memref<8x128xbf16, #tpu.memory_space<vmem>>, vector<8x128xbf16>
    %cst = arith.constant dense<0.000000e+00> : vector<8x128xf32>
    %3 = tpu.matmul %1, %2, %cst {dimension_numbers = #tpu.dot_dimension_numbers<[1], [0], [0], [1], [0, 0, 1, 1], [], []>} : vector<8x8xbf16>, vector<8x128xbf16>, vector<8x128xf32> -> vector<8x128xf32>
    %c0_3 = arith.constant 0 : index
    %c0_4 = arith.constant 0 : index
    %4 = vector.load %arg3[%c0_3, %c0_4] : memref<1x128xf32, #tpu.memory_space<vmem>>, vector<1x128xf32>
    %5 = vector.broadcast %4 : vector<1x128xf32> to vector<8x128xf32>
    %6 = arith.addf %3, %5 : vector<8x128xf32>
    %cst_5 = arith.constant 0.000000e+00 : f32
    %7 = vector.broadcast %cst_5 : f32 to vector<8x128xf32>
    %8 = arith.maximumf %6, %7 : vector<8x128xf32>
    %9 = arith.truncf %8 : vector<8x128xf32> to vector<8x128xbf16>
    %c0_6 = arith.constant 0 : index
    %c0_7 = arith.constant 0 : index
    %10 = vector.load %arg4[%c0_6, %c0_7] : memref<128x128xbf16, #tpu.memory_space<vmem>>, vector<128x128xbf16>
    %cst_8 = arith.constant dense<0.000000e+00> : vector<8x128xf32>
    %11 = tpu.matmul %9, %10, %cst_8 {dimension_numbers = #tpu.dot_dimension_numbers<[1], [0], [0], [1], [0, 0, 1, 1], [], []>} : vector<8x128xbf16>, vector<128x128xbf16>, vector<8x128xf32> -> vector<8x128xf32>
    %c0_9 = arith.constant 0 : index
    %c0_10 = arith.constant 0 : index
    %12 = vector.load %arg5[%c0_9, %c0_10] : memref<1x128xf32, #tpu.memory_space<vmem>>, vector<1x128xf32>
    %13 = vector.broadcast %12 : vector<1x128xf32> to vector<8x128xf32>
    %14 = arith.addf %11, %13 : vector<8x128xf32>
    %cst_11 = arith.constant 0.000000e+00 : f32
    %15 = vector.broadcast %cst_11 : f32 to vector<8x128xf32>
    %16 = arith.maximumf %14, %15 : vector<8x128xf32>
    %17 = arith.truncf %16 : vector<8x128xf32> to vector<8x128xbf16>
    %c0_12 = arith.constant 0 : index
    %c0_13 = arith.constant 0 : index
    %18 = vector.load %arg6[%c0_12, %c0_13] : memref<128x128xbf16, #tpu.memory_space<vmem>>, vector<128x128xbf16>
    %cst_14 = arith.constant dense<0.000000e+00> : vector<8x128xf32>
    %19 = tpu.matmul %17, %18, %cst_14 {dimension_numbers = #tpu.dot_dimension_numbers<[1], [0], [0], [1], [0, 0, 1, 1], [], []>} : vector<8x128xbf16>, vector<128x128xbf16>, vector<8x128xf32> -> vector<8x128xf32>
    %c0_15 = arith.constant 0 : index
    %c0_16 = arith.constant 0 : index
    %20 = vector.load %arg7[%c0_15, %c0_16] : memref<1x128xf32, #tpu.memory_space<vmem>>, vector<1x128xf32>
    %21 = vector.broadcast %20 : vector<1x128xf32> to vector<8x128xf32>
    %22 = arith.addf %19, %21 : vector<8x128xf32>
    %23 = vector.extract_strided_slice %22 {offsets = [0, 0], sizes = [8, 4], strides = [1, 1]} : vector<8x128xf32> to vector<8x4xf32>
    %c0_17 = arith.constant 0 : index
    %c0_18 = arith.constant 0 : index
    %24 = vector.load %arg8[%c0_17, %c0_18] : memref<8x4xf32, #tpu.memory_space<vmem>>, vector<8x4xf32>
    tpu.vector_store %arg8[%c0_17, %c0_18], %23 {strides = array<i32>} : memref<8x4xf32, #tpu.memory_space<vmem>>, vector<8x4xf32>,
    return
  }
  func.func @transform_0(%arg0: i32) -> (i32, i32) {
    %c0_i32 = arith.constant 0 : i32
    %c0_i32_0 = arith.constant 0 : i32
    return %arg0, %c0_i32 : i32, i32
  }
  func.func @transform_1(%arg0: i32) -> (i32, i32) {
    %c0_i32 = arith.constant 0 : i32
    %c0_i32_0 = arith.constant 0 : i32
    %c0_i32_1 = arith.constant 0 : i32
    return %c0_i32, %c0_i32_0 : i32, i32
  }
  func.func @transform_2(%arg0: i32) -> (i32, i32) {
    %c0_i32 = arith.constant 0 : i32
    %c0_i32_0 = arith.constant 0 : i32
    %c0_i32_1 = arith.constant 0 : i32
    return %c0_i32, %c0_i32_0 : i32, i32
  }
  func.func @transform_3(%arg0: i32) -> (i32, i32) {
    %c0_i32 = arith.constant 0 : i32
    %c0_i32_0 = arith.constant 0 : i32
    %c0_i32_1 = arith.constant 0 : i32
    return %c0_i32, %c0_i32_0 : i32, i32
  }
  func.func @transform_4(%arg0: i32) -> (i32, i32) {
    %c0_i32 = arith.constant 0 : i32
    %c0_i32_0 = arith.constant 0 : i32
    %c0_i32_1 = arith.constant 0 : i32
    return %c0_i32, %c0_i32_0 : i32, i32
  }
  func.func @transform_5(%arg0: i32) -> (i32, i32) {
    %c0_i32 = arith.constant 0 : i32
    %c0_i32_0 = arith.constant 0 : i32
    %c0_i32_1 = arith.constant 0 : i32
    return %c0_i32, %c0_i32_0 : i32, i32
  }
  func.func @transform_6(%arg0: i32) -> (i32, i32) {
    %c0_i32 = arith.constant 0 : i32
    %c0_i32_0 = arith.constant 0 : i32
    %c0_i32_1 = arith.constant 0 : i32
    return %c0_i32, %c0_i32_0 : i32, i32
  }
  func.func @transform_7(%arg0: i32) -> (i32, i32) {
    %c0_i32 = arith.constant 0 : i32
    %c0_i32_0 = arith.constant 0 : i32
    return %arg0, %c0_i32 : i32, i32
  }
}

</mosaic_0001>

<llo_original>
// kernel: tpu_custom_call.1
$region0: #{tpu_custom_call.1}
  #allocation0 [shape = 'u32[]', space=smem, size = 0x4, offset = 0x4, fixed_abs, tag = 'smem constant byte address 0x4 - core index']
  #allocation1 [shape = 'u32[72,128]{1,0:T(1,128)}', space=vmem, size = 0x9000, scoped, tag = 'internal scratch']
  %s0 = inlined_call_operand.hbm [shape: f32[8,8], index: 0, kind: input, shape index: {}]
  %s1 = inlined_call_operand.hbm [shape: bf16[8,128], index: 1, kind: input, shape index: {}]
  %s2 = inlined_call_operand.vmem [shape: f32[1,128], index: 2, kind: input, shape index: {}]
  %s3 = inlined_call_operand.hbm [shape: bf16[128,128], index: 3, kind: input, shape index: {}]
  %s4 = inlined_call_operand.vmem [shape: f32[1,128], index: 4, kind: input, shape index: {}]
  %s5 = inlined_call_operand.hbm [shape: bf16[128,128], index: 5, kind: input, shape index: {}]
  %s6 = inlined_call_operand.vmem [shape: f32[1,128], index: 6, kind: input, shape index: {}]
  %s7 = inlined_call_operand.vmem [shape: f32[8,4], index: 7, kind: output, shape index: {}]
  %s8 = sld [smem:[#allocation0]]
  $region54: #{tpu_custom_call.1} parent=0
    _
  %s10 = ssub.s32 1, %s8
  %s11 = scalar_select 0, %s10, %s8
  $region1: #{tpu_custom_call.1} parent=0
    #allocation2 [shape = 'u8[4096]{0}', space=vmem, size = 0x1000, scoped, tag = 'input window, operand 0, single buffered']
    #allocation3 [shape = 's32[1]{0}', space=sflag, size = 0x4, scoped, tag = 'scoped memory for tpu_custom_call.1']
    #allocation4 [shape = 'u8[2048]{0}', space=vmem, size = 0x800, scoped, tag = 'input window, operand 1, single buffered']
    #allocation5 [shape = 's32[1]{0}', space=sflag, size = 0x4, scoped, tag = 'scoped memory for tpu_custom_call.1']
    #allocation6 [shape = 'u8[32768]{0}', space=vmem, size = 0x8000, scoped, tag = 'input window, operand 3, single buffered']
    #allocation7 [shape = 'u8[32768]{0}', space=vmem, size = 0x8000, scoped, tag = 'input window, operand 5, single buffered']
    #allocation8 [shape = 's32[1]{0}', space=sflag, size = 0x4, scoped, tag = 'scoped memory for tpu_custom_call.1']
    %12 = vsyncpa [#allocation3], 0
    %13 = vsyncpa [#allocation5], 0
    %14 = vsyncpa [#allocation8], 0
    // Predicated region
    $region2: #{tpu_custom_call.1} parent=1 // pred_check
      _
    $region3: #{tpu_custom_call.1} parent=1 // pred_check_branch
      %16 = sbr.rel (0) target = $region5
    $region4: #{tpu_custom_call.1} parent=1 // pred_region
      %18 = vsyncadd [#allocation3], 0
      %s20 = sshll.u32 %s0, 4
      %s21 = int_to_ptr.hbm [resolvable:$true] %s20
      %s22 = sshll.u32 [#allocation2], 4
      %s23 = int_to_ptr.vmem [resolvable:$true] %s22
      %25 = dma.hbm_to_vmem [thread:$0]  %s21, 128, %s23, [#allocation3]
    $region5: #{tpu_custom_call.1} parent=1 // pred_fallthru
      _
    // Predicated region
    $region6: #{tpu_custom_call.1} parent=1 // pred_check
      _
    $region7: #{tpu_custom_call.1} parent=1 // pred_check_branch
      %27 = sbr.rel (0) target = $region9
    $region8: #{tpu_custom_call.1} parent=1 // pred_region
      %29 = vsyncadd [#allocation5], 0
      %s31 = sshll.u32 %s1, 4
      %s32 = int_to_ptr.hbm [resolvable:$true] %s31
      %s33 = sshll.u32 [#allocation4], 4
      %s34 = int_to_ptr.vmem [resolvable:$true] %s33
      %36 = dma.hbm_to_vmem [thread:$0]  %s32, 64, %s34, [#allocation5]
    $region9: #{tpu_custom_call.1} parent=1 // pred_fallthru
      _
    // Predicated region
    $region10: #{tpu_custom_call.1} parent=1 // pred_check
      _
    $region11: #{tpu_custom_call.1} parent=1 // pred_check_branch
      %38 = sbr.rel (0) target = $region13
    $region12: #{tpu_custom_call.1} parent=1 // pred_region
      _
    $region13: #{tpu_custom_call.1} parent=1 // pred_fallthru
      _
    // Predicated region
    $region14: #{tpu_custom_call.1} parent=1 // pred_check
      _
    $region15: #{tpu_custom_call.1} parent=1 // pred_check_branch
      %40 = sbr.rel (0) target = $region17
    $region16: #{tpu_custom_call.1} parent=1 // pred_region
      %42 = vsyncadd [#allocation5], 0
      %s43 = sshll.u32 %s3, 4
      %s44 = int_to_ptr.hbm [resolvable:$true] %s43
      %s45 = sshll.u32 [#allocation6], 4
      %s46 = int_to_ptr.vmem [resolvable:$true] %s45
      %51 = dma.hbm_to_vmem [thread:$0]  %s44, 1024, %s46, [#allocation5], 64, 64, 4
    $region17: #{tpu_custom_call.1} parent=1 // pred_fallthru
      _
    // Predicated region
    $region18: #{tpu_custom_call.1} parent=1 // pred_check
      _
    $region19: #{tpu_custom_call.1} parent=1 // pred_check_branch
      %53 = sbr.rel (0) target = $region21
    $region20: #{tpu_custom_call.1} parent=1 // pred_region
      _
    $region21: #{tpu_custom_call.1} parent=1 // pred_fallthru
      _
    // Predicated region
    $region22: #{tpu_custom_call.1} parent=1 // pred_check
      _
    $region23: #{tpu_custom_call.1} parent=1 // pred_check_branch
      %55 = sbr.rel (0) target = $region25
    $region24: #{tpu_custom_call.1} parent=1 // pred_region
      %57 = vsyncadd [#allocation8], 0
      %s58 = sshll.u32 %s5, 4
      %s59 = int_to_ptr.hbm [resolvable:$true] %s58
      %s60 = sshll.u32 [#allocation7], 4
      %s61 = int_to_ptr.vmem [resolvable:$true] %s60
      %66 = dma.hbm_to_vmem [thread:$0]  %s59, 1024, %s61, [#allocation8], 64, 64, 4
    $region25: #{tpu_custom_call.1} parent=1 // pred_fallthru
      _
    // Predicated region
    $region26: #{tpu_custom_call.1} parent=1 // pred_check
      _
    $region27: #{tpu_custom_call.1} parent=1 // pred_check_branch
      %68 = sbr.rel (0) target = $region29
    $region28: #{tpu_custom_call.1} parent=1 // pred_region
      _
    $region29: #{tpu_custom_call.1} parent=1 // pred_fallthru
      _
    // Predicated region
    $region30: #{tpu_custom_call.1} parent=1 // pred_check
      _
    $region31: #{tpu_custom_call.1} parent=1 // pred_check_branch
      %70 = sbr.rel (0) target = $region33
    $region32: #{tpu_custom_call.1} parent=1 // pred_region
      %72 = dma.done [#allocation3], 128
    $region33: #{tpu_custom_call.1} parent=1 // pred_fallthru
      _
    // Predicated region
    $region34: #{tpu_custom_call.1} parent=1 // pred_check
      _
    $region35: #{tpu_custom_call.1} parent=1 // pred_check_branch
      %74 = sbr.rel (0) target = $region37
    $region36: #{tpu_custom_call.1} parent=1 // pred_region
      %76 = dma.done [#allocation5], 64
    $region37: #{tpu_custom_call.1} parent=1 // pred_fallthru
      _
    // Predicated region
    $region38: #{tpu_custom_call.1} parent=1 // pred_check
      _
    $region39: #{tpu_custom_call.1} parent=1 // pred_check_branch
      %78 = sbr.rel (0) target = $region41
    $region40: #{tpu_custom_call.1} parent=1 // pred_region
      %80 = dma.done [#allocation5], 1024
    $region41: #{tpu_custom_call.1} parent=1 // pred_fallthru
      _
    // Predicated region
    $region42: #{tpu_custom_call.1} parent=1 // pred_check
      _
    $region43: #{tpu_custom_call.1} parent=1 // pred_check_branch
      %82 = sbr.rel (0) target = $region45
    $region44: #{tpu_custom_call.1} parent=1 // pred_region
      %84 = dma.done [#allocation8], 1024
    $region45: #{tpu_custom_call.1} parent=1 // pred_fallthru
      _
    %v86 = vld [vmem:[#allocation2] sm:$0xff]
    %v87 = vpack.c.bf16 %v86, %v86
    %v88 = vld [vmem:[#allocation4] sm:$0xf]
    %v89 = vld [vmem:[%s2] sm:$0x1]
    %v91 = vperm.slane %v89, 0
    %vm93 = vcmask 64512
    %v95 = vsel %vm93, %v87, 0
    %vm97 = vcmask 1043456
    %v99 = vsel %vm97, %v88, 0
    %101 = vmatpush.bf16.msra.mxu0 0
    %102 = vmatpush.bf16.msra.mxu0 0
    %103 = vmatpush.bf16.msra.mxu0 0
    %104 = vmatpush.bf16.msra.mxu0 0
    %105 = vmatpush.bf16.msra.mxu0 0
    %106 = vmatpush.bf16.msra.mxu0 0
    %107 = vmatpush.bf16.msra.mxu0 0
    %108 = vmatpush.bf16.msra.mxu0 %v99
    %109 = vmatmul.bf16.gmra.mxu0 %v95
    %v110 = vpop.f32.mrf.mxu0
    %v111 = vadd.f32 %v91, %v110
    %v112 = vpop.f32.mrf.mxu0
    %113 = vdwg.mxu0
    %v114 = vmax.f32 %v111, 0.0
    %v115 = vpack.c.bf16 %v114, %v114
    %v116 = vld [vmem:[#allocation6] sm:$0xf]
    %v117 = vld [vmem:[#allocation6 + $0x4] sm:$0xf]
    %v118 = vld [vmem:[#allocation6 + $0x8] sm:$0xf]
    %v119 = vld [vmem:[#allocation6 + $0xc] sm:$0xf]
    %v120 = vld [vmem:[#allocation6 + $0x10] sm:$0xf]
    %v121 = vld [vmem:[#allocation6 + $0x14] sm:$0xf]
    %v122 = vld [vmem:[#allocation6 + $0x18] sm:$0xf]
    %v123 = vld [vmem:[#allocation6 + $0x1c] sm:$0xf]
    %v124 = vld [vmem:[#allocation6 + $0x20] sm:$0xf]
    %v125 = vld [vmem:[#allocation6 + $0x24] sm:$0xf]
    %v126 = vld [vmem:[#allocation6 + $0x28] sm:$0xf]
    %v127 = vld [vmem:[#allocation6 + $0x2c] sm:$0xf]
    %v128 = vld [vmem:[#allocation6 + $0x30] sm:$0xf]
    %v129 = vld [vmem:[#allocation6 + $0x34] sm:$0xf]
    %v130 = vld [vmem:[#allocation6 + $0x38] sm:$0xf]
    %v131 = vld [vmem:[#allocation6 + $0x3c] sm:$0xf]
    %v132 = vld [vmem:[%s4] sm:$0x1]
    %v134 = vperm.slane %v132, 0
    %v152 = vunpack.c.l.b16 %v116
    %v153 = vunpack.c.l.b16 %v117
    %v154 = vunpack.c.l.b16 %v118
    %v155 = vunpack.c.l.b16 %v119
    %v156 = vunpack.c.l.b16 %v120
    %v157 = vunpack.c.l.b16 %v121
    %v158 = vunpack.c.l.b16 %v122
    %v159 = vunpack.c.l.b16 %v123
    %v160 = vunpack.c.l.b16 %v124
    %v161 = vunpack.c.l.b16 %v125
    %v162 = vunpack.c.l.b16 %v126
    %v163 = vunpack.c.l.b16 %v127
    %v164 = vunpack.c.l.b16 %v128
    %v165 = vunpack.c.l.b16 %v129
    %v166 = vunpack.c.l.b16 %v130
    %v167 = vunpack.c.l.b16 %v131
    %v168 = vpack.c.b16 %v153, %v152
    %v169 = vpack.c.b16 %v155, %v154
    %v170 = vpack.c.b16 %v157, %v156
    %v171 = vpack.c.b16 %v159, %v158
    %v172 = vpack.c.b16 %v161, %v160
    %v173 = vpack.c.b16 %v163, %v162
    %v174 = vpack.c.b16 %v165, %v164
    %v175 = vpack.c.b16 %v167, %v166
    %184 = vmatpush.bf16.msra.mxu0 %v175
    %185 = vmatpush.bf16.msra.mxu0 %v174
    %186 = vmatpush.bf16.msra.mxu0 %v173
    %187 = vmatpush.bf16.msra.mxu0 %v172
    %188 = vmatpush.bf16.msra.mxu0 %v171
    %189 = vmatpush.bf16.msra.mxu0 %v170
    %190 = vmatpush.bf16.msra.mxu0 %v169
    %191 = vmatpush.bf16.msra.mxu0 %v168
    %192 = vmatmul.bf16.gmra.mxu0 %v115
    %v193 = vpop.f32.mrf.mxu0
    %v194 = vadd.f32 %v134, %v193
    %v195 = vpop.f32.mrf.mxu0
    %196 = vdwg.mxu0
    %v197 = vmax.f32 %v194, 0.0
    %v198 = vpack.c.bf16 %v197, %v197
    %v199 = vld [vmem:[#allocation7] sm:$0xf]
    %v200 = vld [vmem:[#allocation7 + $0x4] sm:$0xf]
    %v201 = vld [vmem:[#allocation7 + $0x8] sm:$0xf]
    %v202 = vld [vmem:[#allocation7 + $0xc] sm:$0xf]
    %v203 = vld [vmem:[#allocation7 + $0x10] sm:$0xf]
    %v204 = vld [vmem:[#allocation7 + $0x14] sm:$0xf]
    %v205 = vld [vmem:[#allocation7 + $0x18] sm:$0xf]
    %v206 = vld [vmem:[#allocation7 + $0x1c] sm:$0xf]
    %v207 = vld [vmem:[#allocation7 + $0x20] sm:$0xf]
    %v208 = vld [vmem:[#allocation7 + $0x24] sm:$0xf]
    %v209 = vld [vmem:[#allocation7 + $0x28] sm:$0xf]
    %v210 = vld [vmem:[#allocation7 + $0x2c] sm:$0xf]
    %v211 = vld [vmem:[#allocation7 + $0x30] sm:$0xf]
    %v212 = vld [vmem:[#allocation7 + $0x34] sm:$0xf]
    %v213 = vld [vmem:[#allocation7 + $0x38] sm:$0xf]
    %v214 = vld [vmem:[#allocation7 + $0x3c] sm:$0xf]
    %v215 = vld [vmem:[%s6] sm:$0x1]
    %v217 = vperm.slane %v215, 0
    %v235 = vunpack.c.l.b16 %v199
    %v236 = vunpack.c.l.b16 %v200
    %v237 = vunpack.c.l.b16 %v201
    %v238 = vunpack.c.l.b16 %v202
    %v239 = vunpack.c.l.b16 %v203
    %v240 = vunpack.c.l.b16 %v204
    %v241 = vunpack.c.l.b16 %v205
    %v242 = vunpack.c.l.b16 %v206
    %v243 = vunpack.c.l.b16 %v207
    %v244 = vunpack.c.l.b16 %v208
    %v245 = vunpack.c.l.b16 %v209
    %v246 = vunpack.c.l.b16 %v210
    %v247 = vunpack.c.l.b16 %v211
    %v248 = vunpack.c.l.b16 %v212
    %v249 = vunpack.c.l.b16 %v213
    %v250 = vunpack.c.l.b16 %v214
    %v251 = vpack.c.b16 %v236, %v235
    %v252 = vpack.c.b16 %v238, %v237
    %v253 = vpack.c.b16 %v240, %v239
    %v254 = vpack.c.b16 %v242, %v241
    %v255 = vpack.c.b16 %v244, %v243
    %v256 = vpack.c.b16 %v246, %v245
    %v257 = vpack.c.b16 %v248, %v247
    %v258 = vpack.c.b16 %v250, %v249
    %267 = vmatpush.bf16.msra.mxu0 %v258
    %268 = vmatpush.bf16.msra.mxu0 %v257
    %269 = vmatpush.bf16.msra.mxu0 %v256
    %270 = vmatpush.bf16.msra.mxu0 %v255
    %271 = vmatpush.bf16.msra.mxu0 %v254
    %272 = vmatpush.bf16.msra.mxu0 %v253
    %273 = vmatpush.bf16.msra.mxu0 %v252
    %274 = vmatpush.bf16.msra.mxu0 %v251
    %275 = vmatmul.bf16.gmra.mxu0 %v198
    %v276 = vpop.f32.mrf.mxu0
    %v277 = vadd.f32 %v217, %v276
    %v278 = vpop.f32.mrf.mxu0
    %279 = vdwg.mxu0
    %vm280 = vcmask 31744
    %281 = vst.msk [vmem:[%s7] sm:$0xff] %vm280, %v277
    // Predicated region
    $region46: #{tpu_custom_call.1} parent=1 // pred_check
      _
    $region47: #{tpu_custom_call.1} parent=1 // pred_check_branch
      %283 = sbr.rel (0) target = $region49
    $region48: #{tpu_custom_call.1} parent=1 // pred_region
      _
    $region49: #{tpu_custom_call.1} parent=1 // pred_fallthru
      _
    // Predicated region
    $region50: #{tpu_custom_call.1} parent=1 // pred_check
      _
    $region51: #{tpu_custom_call.1} parent=1 // pred_check_branch
      %285 = sbr.rel (0) target = $region53
    $region52: #{tpu_custom_call.1} parent=1 // pred_region
      _
    $region53: #{tpu_custom_call.1} parent=1 // pred_fallthru
      _
    %286 = vsyncpa [#allocation3], 1
    %287 = vsyncpa [#allocation5], 1
    %288 = vsyncpa [#allocation8], 1

</llo_original>
